<compile_context>
chip_gen: v7x
topology: tpu7x:2x2x1
jax: 0.10.0
libtpu: 0.0.40
codegen_flags: <defaults>
</compile_context>

<pallas_src>
import functools

import jax
import jax.numpy as jnp
import numpy as np
from jax.experimental import pallas as pl
from jax.experimental.pallas import tpu as pltpu


def _round_up(x, m):
    return (x + m - 1) // m * m


def _pick_lane_tile(nhw_padded):
    # One grid step at small sizes; lane-parallel tiles once the slab is big
    # enough to be worth splitting across TensorCores / pipelining (v7x).
    for t in (8192, 4096, 2048, 1024):
        if nhw_padded % t == 0 and nhw_padded // t >= 2:
            return t
    return nhw_padded


# ----------------------------------------------------------------------------
# Fused Pallas kernel: (conv_k + bias + ReLU) -> (conv1x1 + bias + ReLU)
# ----------------------------------------------------------------------------
def _dense_block_kernel(p_ref, w1_ref, b1_ref, w2_ref, b2_ref, o_ref):
    """One lane tile of the fused block.

    p_ref : (K1p, T)     im2col patches, lane-dense, compute dtype
    w1_ref: (Cmid, K1p)  layer-1 (k x k) weights, compute dtype
    b1_ref: (Cmid, 1)    f32
    w2_ref: (Cout, Cmid) layer-2 (1 x 1) weights, compute dtype
    b2_ref: (Cout, 1)    f32
    o_ref : (Cout, T)
    """
    # Layer 1: k x k conv as one MXU contraction, f32 accumulate.
    h = jnp.dot(w1_ref[...], p_ref[...], preferred_element_type=jnp.float32)
    h = jnp.maximum(h + b1_ref[...], 0.0)          # bias + ReLU (f32)

    # Layer 2: 1x1 conv on the VMEM-resident intermediate.
    if h.dtype != w2_ref.dtype:                    # bf16 path: feed MXU bf16
        h = h.astype(w2_ref.dtype)
    y = jnp.dot(w2_ref[...], h, preferred_element_type=jnp.float32)
    y = jnp.maximum(y + b2_ref[...], 0.0)          # bias + ReLU (f32)

    o_ref[...] = y.astype(o_ref.dtype)


# ----------------------------------------------------------------------------
# Wrapper: layout glue (reflection pad + im2col + padding) in JAX,
#          compute in Pallas.
# ----------------------------------------------------------------------------
def dense_block_light_forward(params, x, *, stride=1,
                              compute_dtype=jnp.bfloat16):
    """x: (N, Cin, H, W) NCHW float32  ->  (N, Cout, H, W)."""
    # TODO(synk): general stride support; the module is used with stride=1.
    assert stride == 1, "only stride=1 is implemented"

    w1, b1 = params["w1"], params["b1"]   # (Cmid, Cin, kh, kw), (Cmid,)
    w2, b2 = params["w2"], params["b2"]   # (Cout, Cmid, 1, 1),  (Cout,)

    N, Cin, H, W = x.shape
    Cmid, _, kh, kw = w1.shape
    Cout = w2.shape[0]
    pad = kh // 2
    assert pad < H and pad < W, "reflection pad requires pad < H and pad < W"

    HW = H * W
    NHW = N * HW
    K1 = kh * kw * Cin

    xp = (jnp.pad(x, ((0, 0), (0, 0), (pad, pad), (pad, pad)), mode="reflect")
          if pad > 0 else x)

    # im2col once in the wrapper; K order = (i, j, ci), lane order = (n, h, w).
    # TODO(synk): at large H*W move im2col into the kernel (DMA only the padded
    # input and assemble the K slab in VMEM) to cut HBM traffic ~kh*kw x.
    cols = [jnp.transpose(xp[:, :, i:i + H, j:j + W],
                          (1, 0, 2, 3)).reshape(Cin, NHW)
            for i in range(kh) for j in range(kw)]
    patches = jnp.concatenate(cols, axis=0)                     # (K1, NHW)

    # Weights reshaped to match the (i, j, ci) ordering of the K axis.
    w1_2d = jnp.transpose(w1, (0, 2, 3, 1)).reshape(Cmid, K1)   # (Cmid, K1)
    w2_2d = w2.reshape(Cout, Cmid)                              # (Cout, Cmid)
    b1_2d = b1.reshape(Cmid, 1).astype(jnp.float32)
    b2_2d = b2.reshape(Cout, 1).astype(jnp.float32)

    # Pad K to a clean sublane-packing multiple (16 for bf16, 8 for f32) and
    # the lane axis to a multiple of 128 so stores stay dense and unmasked.
    k_mult = 16 if compute_dtype == jnp.bfloat16 else 8
    K1p = _round_up(K1, k_mult)
    NHWp = _round_up(NHW, 128)
    if K1p != K1 or NHWp != NHW:
        patches = jnp.pad(patches, ((0, K1p - K1), (0, NHWp - NHW)))
    if K1p != K1:
        w1_2d = jnp.pad(w1_2d, ((0, 0), (0, K1p - K1)))

    patches = patches.astype(compute_dtype)
    w1_2d = w1_2d.astype(compute_dtype)
    w2_2d = w2_2d.astype(compute_dtype)

    T = _pick_lane_tile(NHWp)
    num_tiles = NHWp // T

    bytes_accessed = (patches.size * patches.dtype.itemsize
                      + w1_2d.size * w1_2d.dtype.itemsize
                      + w2_2d.size * w2_2d.dtype.itemsize
                      + (b1_2d.size + b2_2d.size) * 4
                      + Cout * NHWp * x.dtype.itemsize)
    cost = pl.CostEstimate(
        flops=2 * NHW * (Cmid * K1 + Cout * Cmid),
        transcendentals=0,
        bytes_accessed=int(bytes_accessed))

    out = pl.pallas_call(
        _dense_block_kernel,
        out_shape=jax.ShapeDtypeStruct((Cout, NHWp), x.dtype),
        grid=(num_tiles,),
        in_specs=[
            pl.BlockSpec((K1p, T), lambda t: (0, t)),
            pl.BlockSpec((Cmid, K1p), lambda t: (0, 0)),
            pl.BlockSpec((Cmid, 1), lambda t: (0, 0)),
            pl.BlockSpec((Cout, Cmid), lambda t: (0, 0)),
            pl.BlockSpec((Cout, 1), lambda t: (0, 0)),
        ],
        out_specs=pl.BlockSpec((Cout, T), lambda t: (0, t)),
        compiler_params=pltpu.CompilerParams(
            dimension_semantics=("parallel",)),
        cost_estimate=cost,
    )(patches, w1_2d, b1_2d, w2_2d, b2_2d)

    out = out[:, :NHW].reshape(Cout, N, H, W)
    return jnp.transpose(out, (1, 0, 2, 3))                     # NCHW


# ----------------------------------------------------------------------------
# Pure-JAX reference (matches the PyTorch module, NCHW / OIHW)
# ----------------------------------------------------------------------------
def _conv_layer_ref(x, w, b):
    pad = w.shape[2] // 2
    if pad > 0:
        x = jnp.pad(x, ((0, 0), (0, 0), (pad, pad), (pad, pad)), mode="reflect")
    y = jax.lax.conv_general_dilated(
        x, w, window_strides=(1, 1), padding="VALID",
        dimension_numbers=("NCHW", "OIHW", "NCHW"),
        precision=jax.lax.Precision.HIGHEST)
    return jax.nn.relu(y + b.reshape(1, -1, 1, 1))


def dense_block_light_ref(params, x):
    h = _conv_layer_ref(x, params["w1"], params["b1"])
    return _conv_layer_ref(h, params["w2"], params["b2"])


# ----------------------------------------------------------------------------
# Deterministic parameter initialization (shapes from __init__)
# ----------------------------------------------------------------------------
def _init_conv(key, cin, cout, k):
    kw_, kb = jax.random.split(key)
    fan_in = k * k * cin
    bound = 1.0 / np.sqrt(fan_in)
    w = jax.random.uniform(kw_, (cout, cin, k, k), jnp.float32, -bound, bound)
    b = jax.random.uniform(kb, (cout,), jnp.float32, -bound, bound)
    return w, b


def init_dense_block_light(key, in_channels, out_channels, kernel_size):
    mid = in_channels // 2
    k1, k2 = jax.random.split(key)
    w1, b1 = _init_conv(k1, in_channels, mid, kernel_size)
    w2, b2 = _init_conv(k2, mid, out_channels, 1)
    return {"w1": w1, "b1": b1, "w2": w2, "b2": b2}


if __name__ == "__main__":
    key = jax.random.PRNGKey(0)

    # DenseBlock_light(in_channels=8, out_channels=16, kernel_size=3, stride=1)
    N, Cin, H, W = 2, 8, 16, 16
    Cout, ksize, stride = 16, 3, 1

    k_params, k_data = jax.random.split(key)
    params = init_dense_block_light(k_params, Cin, Cout, ksize)
    x = jax.random.normal(k_data, (N, Cin, H, W), jnp.float32)   # NCHW

    ref = dense_block_light_ref(params, x)

    # Default bf16 MXU path (f32 accumulate): bf16 input-quantization tolerance.
    fwd_bf16 = jax.jit(functools.partial(
        dense_block_light_forward, stride=stride, compute_dtype=jnp.bfloat16))
    out_bf16 = jax.block_until_ready(fwd_bf16(params, x))
    np.testing.assert_allclose(np.asarray(out_bf16), np.asarray(ref),
                               rtol=2e-2, atol=2e-2)

    # f32 path: tight check against the reference.
    fwd_f32 = jax.jit(functools.partial(
        dense_block_light_forward, stride=stride, compute_dtype=jnp.float32))
    out_f32 = jax.block_until_ready(fwd_f32(params, x))
    np.testing.assert_allclose(np.asarray(out_f32), np.asarray(ref),
                               rtol=1e-4, atol=1e-4)

    print("KERNEL_OK")
</pallas_src>

<mosaic_0001>
module attributes {stable_mosaic.version = 11 : i64} {
  func.func @_dense_block_kernel(%arg0: i32, %arg1: memref<80x512xbf16, #tpu.memory_space<vmem>>, %arg2: memref<4x80xbf16, #tpu.memory_space<vmem>>, %arg3: memref<4x1xf32, #tpu.memory_space<vmem>>, %arg4: memref<16x4xbf16, #tpu.memory_space<vmem>>, %arg5: memref<16x1xf32, #tpu.memory_space<vmem>>, %arg6: memref<16x512xf32, #tpu.memory_space<vmem>>) attributes {dimension_semantics = [#tpu.dimension_semantics<parallel>], iteration_bounds = array<i64: 1>, scalar_prefetch = 0 : i64, scratch_operands = 0 : i64, tpu.core_type = #tpu.core_type<tc>, window_params = [{transform_indices = @transform_0, window_bounds = array<i64: 80, 512>}, {pipeline_mode = #tpu.pipeline_mode<synchronous>, transform_indices = @transform_1, window_bounds = array<i64: 4, 80>}, {pipeline_mode = #tpu.pipeline_mode<synchronous>, transform_indices = @transform_2, window_bounds = array<i64: 4, 1>}, {pipeline_mode = #tpu.pipeline_mode<synchronous>, transform_indices = @transform_3, window_bounds = array<i64: 16, 4>}, {pipeline_mode = #tpu.pipeline_mode<synchronous>, transform_indices = @transform_4, window_bounds = array<i64: 16, 1>}, {transform_indices = @transform_5, window_bounds = array<i64: 16, 512>}]} {
    %c0 = arith.constant 0 : index
    %c0_0 = arith.constant 0 : index
    %0 = vector.load %arg2[%c0, %c0_0] : memref<4x80xbf16, #tpu.memory_space<vmem>>, vector<4x80xbf16>
    %c0_1 = arith.constant 0 : index
    %c0_2 = arith.constant 0 : index
    %1 = vector.load %arg1[%c0_1, %c0_2] : memref<80x512xbf16, #tpu.memory_space<vmem>>, vector<80x512xbf16>
    %cst = arith.constant dense<0.000000e+00> : vector<4x512xf32>
    %2 = tpu.matmul %0, %1, %cst {dimension_numbers = #tpu.dot_dimension_numbers<[1], [0], [0], [1], [0, 0, 1, 1], [], []>} : vector<4x80xbf16>, vector<80x512xbf16>, vector<4x512xf32> -> vector<4x512xf32>
    %c0_3 = arith.constant 0 : index
    %c0_4 = arith.constant 0 : index
    %3 = vector.load %arg3[%c0_3, %c0_4] : memref<4x1xf32, #tpu.memory_space<vmem>>, vector<4x1xf32>
    %4 = vector.broadcast %3 : vector<4x1xf32> to vector<4x512xf32>
    %5 = arith.addf %2, %4 : vector<4x512xf32>
    %cst_5 = arith.constant 0.000000e+00 : f32
    %6 = vector.broadcast %cst_5 : f32 to vector<4x512xf32>
    %7 = arith.maximumf %5, %6 : vector<4x512xf32>
    %8 = arith.truncf %7 : vector<4x512xf32> to vector<4x512xbf16>
    %c0_6 = arith.constant 0 : index
    %c0_7 = arith.constant 0 : index
    %9 = vector.load %arg4[%c0_6, %c0_7] : memref<16x4xbf16, #tpu.memory_space<vmem>>, vector<16x4xbf16>
    %cst_8 = arith.constant dense<0.000000e+00> : vector<16x512xf32>
    %10 = tpu.matmul %9, %8, %cst_8 {dimension_numbers = #tpu.dot_dimension_numbers<[1], [0], [0], [1], [0, 0, 1, 1], [], []>} : vector<16x4xbf16>, vector<4x512xbf16>, vector<16x512xf32> -> vector<16x512xf32>
    %c0_9 = arith.constant 0 : index
    %c0_10 = arith.constant 0 : index
    %11 = vector.load %arg5[%c0_9, %c0_10] : memref<16x1xf32, #tpu.memory_space<vmem>>, vector<16x1xf32>
    %12 = vector.broadcast %11 : vector<16x1xf32> to vector<16x512xf32>
    %13 = arith.addf %10, %12 : vector<16x512xf32>
    %cst_11 = arith.constant 0.000000e+00 : f32
    %14 = vector.broadcast %cst_11 : f32 to vector<16x512xf32>
    %15 = arith.maximumf %13, %14 : vector<16x512xf32>
    %c0_12 = arith.constant 0 : index
    %c0_13 = arith.constant 0 : index
    %16 = vector.load %arg6[%c0_12, %c0_13] : memref<16x512xf32, #tpu.memory_space<vmem>>, vector<16x512xf32>
    tpu.vector_store %arg6[%c0_12, %c0_13], %15 {strides = array<i32>} : memref<16x512xf32, #tpu.memory_space<vmem>>, vector<16x512xf32>,
    return
  }
  func.func @transform_0(%arg0: i32) -> (i32, i32) {
    %c0_i32 = arith.constant 0 : i32
    %c0_i32_0 = arith.constant 0 : i32
    return %c0_i32, %arg0 : i32, i32
  }
  func.func @transform_1(%arg0: i32) -> (i32, i32) {
    %c0_i32 = arith.constant 0 : i32
    %c0_i32_0 = arith.constant 0 : i32
    %c0_i32_1 = arith.constant 0 : i32
    return %c0_i32, %c0_i32_0 : i32, i32
  }
  func.func @transform_2(%arg0: i32) -> (i32, i32) {
    %c0_i32 = arith.constant 0 : i32
    %c0_i32_0 = arith.constant 0 : i32
    %c0_i32_1 = arith.constant 0 : i32
    return %c0_i32, %c0_i32_0 : i32, i32
  }
  func.func @transform_3(%arg0: i32) -> (i32, i32) {
    %c0_i32 = arith.constant 0 : i32
    %c0_i32_0 = arith.constant 0 : i32
    %c0_i32_1 = arith.constant 0 : i32
    return %c0_i32, %c0_i32_0 : i32, i32
  }
  func.func @transform_4(%arg0: i32) -> (i32, i32) {
    %c0_i32 = arith.constant 0 : i32
    %c0_i32_0 = arith.constant 0 : i32
    %c0_i32_1 = arith.constant 0 : i32
    return %c0_i32, %c0_i32_0 : i32, i32
  }
  func.func @transform_5(%arg0: i32) -> (i32, i32) {
    %c0_i32 = arith.constant 0 : i32
    %c0_i32_0 = arith.constant 0 : i32
    return %c0_i32, %arg0 : i32, i32
  }
}

</mosaic_0001>

<llo_original>
// kernel: dense_block_light_forward.1
$region0: #{dense_block_light_forward.1}
  #allocation0 [shape = 'u32[]', space=smem, size = 0x4, offset = 0x4, fixed_abs, tag = 'smem constant byte address 0x4 - core index']
  #allocation1 [shape = 'u32[144,128]{1,0:T(1,128)}', space=vmem, size = 0x12000, scoped, tag = 'internal scratch']
  %s0 = inlined_call_operand.vmem [shape: bf16[80,512], index: 0, kind: input, shape index: {}]
  %s1 = inlined_call_operand.vmem [shape: bf16[4,80], index: 1, kind: input, shape index: {}]
  %s2 = inlined_call_operand.vmem [shape: f32[4,1], index: 2, kind: input, shape index: {}]
  %s3 = inlined_call_operand.vmem [shape: bf16[16,4], index: 3, kind: input, shape index: {}]
  %s4 = inlined_call_operand.vmem [shape: f32[16,1], index: 4, kind: input, shape index: {}]
  %s5 = inlined_call_operand.vmem [shape: f32[16,512], index: 5, kind: output, shape index: {}]
  %s6 = sld [smem:[#allocation0]]
  $region30: #{dense_block_light_forward.1} parent=0
    _
  %s8 = ssub.s32 1, %s6
  %s9 = scalar_select 0, %s8, %s6
  // Predicated region
  $region2: #{dense_block_light_forward.1} parent=0 // pred_check
    _
  $region3: #{dense_block_light_forward.1} parent=0 // pred_check_branch
    %11 = sbr.rel (0) target = $region5
  $region4: #{dense_block_light_forward.1} parent=0 // pred_region
    _
  $region5: #{dense_block_light_forward.1} parent=0 // pred_fallthru
    _
  // Predicated region
  $region6: #{dense_block_light_forward.1} parent=0 // pred_check
    _
  $region7: #{dense_block_light_forward.1} parent=0 // pred_check_branch
    %13 = sbr.rel (0) target = $region9
  $region8: #{dense_block_light_forward.1} parent=0 // pred_region
    _
  $region9: #{dense_block_light_forward.1} parent=0 // pred_fallthru
    _
  // Predicated region
  $region10: #{dense_block_light_forward.1} parent=0 // pred_check
    _
  $region11: #{dense_block_light_forward.1} parent=0 // pred_check_branch
    %15 = sbr.rel (0) target = $region13
  $region12: #{dense_block_light_forward.1} parent=0 // pred_region
    _
  $region13: #{dense_block_light_forward.1} parent=0 // pred_fallthru
    _
  // Predicated region
  $region14: #{dense_block_light_forward.1} parent=0 // pred_check
    _
  $region15: #{dense_block_light_forward.1} parent=0 // pred_check_branch
    %17 = sbr.rel (0) target = $region17
  $region16: #{dense_block_light_forward.1} parent=0 // pred_region
    _
  $region17: #{dense_block_light_forward.1} parent=0 // pred_fallthru
    _
  // Predicated region
  $region18: #{dense_block_light_forward.1} parent=0 // pred_check
    _
  $region19: #{dense_block_light_forward.1} parent=0 // pred_check_branch
    %19 = sbr.rel (0) target = $region21
  $region20: #{dense_block_light_forward.1} parent=0 // pred_region
    _
  $region21: #{dense_block_light_forward.1} parent=0 // pred_fallthru
    _
  %v21 = vld [vmem:[%s1] sm:$0x3]
  %v22 = vld [vmem:[%s0] sm:$0xff]
  %v23 = vld [vmem:[%s0 + $0x8] sm:$0xff]
  %v24 = vld [vmem:[%s0 + $0x10] sm:$0xff]
  %v25 = vld [vmem:[%s0 + $0x18] sm:$0xff]
  %v26 = vld [vmem:[%s0 + $0x20] sm:$0xff]
  %v27 = vld [vmem:[%s0 + $0x28] sm:$0xff]
  %v28 = vld [vmem:[%s0 + $0x30] sm:$0xff]
  %v29 = vld [vmem:[%s0 + $0x38] sm:$0xff]
  %v30 = vld [vmem:[%s0 + $0x40] sm:$0xff]
  %v31 = vld [vmem:[%s0 + $0x48] sm:$0xff]
  %v32 = vld [vmem:[%s0 + $0x50] sm:$0xff]
  %v33 = vld [vmem:[%s0 + $0x58] sm:$0xff]
  %v34 = vld [vmem:[%s0 + $0x60] sm:$0xff]
  %v35 = vld [vmem:[%s0 + $0x68] sm:$0xff]
  %v36 = vld [vmem:[%s0 + $0x70] sm:$0xff]
  %v37 = vld [vmem:[%s0 + $0x78] sm:$0xff]
  %v38 = vld [vmem:[%s0 + $0x80] sm:$0xff]
  %v39 = vld [vmem:[%s0 + $0x88] sm:$0xff]
  %v40 = vld [vmem:[%s0 + $0x90] sm:$0xff]
  %v41 = vld [vmem:[%s0 + $0x98] sm:$0xff]
  %v42 = vld [vmem:[%s2] sm:$0xf]
  %44 = vset.pattern.permute.xlu0 0
  %45 = vperm.xlu0 %44, %v42
  %v46 = vpop.permute.xlu0 %45
  %v68 = vunpack.c.l.b16 %v22
  %v69 = vunpack.c.h.b16 %v22
  %v70 = vunpack.c.l.b16 %v23
  %v71 = vunpack.c.h.b16 %v23
  %v72 = vunpack.c.l.b16 %v24
  %v73 = vunpack.c.h.b16 %v24
  %v74 = vunpack.c.l.b16 %v25
  %v75 = vunpack.c.h.b16 %v25
  %v76 = vunpack.c.l.b16 %v26
  %v77 = vunpack.c.h.b16 %v26
  %v78 = vunpack.c.l.b16 %v27
  %v79 = vunpack.c.h.b16 %v27
  %v80 = vunpack.c.l.b16 %v28
  %v81 = vunpack.c.h.b16 %v28
  %v82 = vunpack.c.l.b16 %v29
  %v83 = vunpack.c.h.b16 %v29
  %v84 = vunpack.c.l.b16 %v30
  %v85 = vunpack.c.h.b16 %v30
  %v86 = vunpack.c.l.b16 %v31
  %v87 = vunpack.c.h.b16 %v31
  %v88 = vunpack.c.l.b16 %v32
  %v89 = vunpack.c.h.b16 %v32
  %v90 = vunpack.c.l.b16 %v33
  %v91 = vunpack.c.h.b16 %v33
  %v92 = vunpack.c.l.b16 %v34
  %v93 = vunpack.c.h.b16 %v34
  %v94 = vunpack.c.l.b16 %v35
  %v95 = vunpack.c.h.b16 %v35
  %v96 = vunpack.c.l.b16 %v36
  %v97 = vunpack.c.h.b16 %v36
  %v98 = vunpack.c.l.b16 %v37
  %v99 = vunpack.c.h.b16 %v37
  %v100 = vunpack.c.l.b16 %v38
  %v101 = vunpack.c.h.b16 %v38
  %v102 = vunpack.c.l.b16 %v39
  %v103 = vunpack.c.h.b16 %v39
  %v104 = vunpack.c.l.b16 %v40
  %v105 = vunpack.c.h.b16 %v40
  %v106 = vunpack.c.l.b16 %v41
  %v107 = vunpack.c.h.b16 %v41
  %v108 = vpack.c.b16 %v72, %v68
  %v109 = vpack.c.b16 %v73, %v69
  %v110 = vpack.c.b16 %v74, %v70
  %v111 = vpack.c.b16 %v75, %v71
  %v112 = vpack.c.b16 %v80, %v76
  %v113 = vpack.c.b16 %v81, %v77
  %v114 = vpack.c.b16 %v82, %v78
  %v115 = vpack.c.b16 %v83, %v79
  %v116 = vpack.c.b16 %v88, %v84
  %v117 = vpack.c.b16 %v89, %v85
  %v118 = vpack.c.b16 %v90, %v86
  %v119 = vpack.c.b16 %v91, %v87
  %v120 = vpack.c.b16 %v96, %v92
  %v121 = vpack.c.b16 %v97, %v93
  %v122 = vpack.c.b16 %v98, %v94
  %v123 = vpack.c.b16 %v99, %v95
  %v124 = vpack.c.b16 %v104, %v100
  %v125 = vpack.c.b16 %v105, %v101
  %v126 = vpack.c.b16 %v106, %v102
  %v127 = vpack.c.b16 %v107, %v103
  %vm148 = vcmask 654336
  %v150 = vsel %vm148, %v21, 0
  %152 = vmatprep.subr.bf16.mxu0 %v109
  %153 = vmatpush1.bf16.msra.mxu0 %v108
  %154 = vmatprep.subr.bf16.mxu0 %v113
  %155 = vmatpush1.bf16.msra.mxu0 %v112
  %156 = vmatprep.subr.bf16.mxu0 %v117
  %157 = vmatpush1.bf16.msra.mxu0 %v116
  %158 = vmatprep.subr.bf16.mxu0 %v121
  %159 = vmatpush1.bf16.msra.mxu0 %v120
  %160 = vmatprep.subr.bf16.mxu0 %v125
  %161 = vmatpush1.bf16.msra.mxu0 %v124
  %162 = vmatprep.subr.bf16.mxu0 0
  %163 = vmatpush1.bf16.msra.mxu0 0
  %164 = vmatprep.subr.bf16.mxu0 0
  %165 = vmatpush1.bf16.msra.mxu0 0
  %166 = vmatprep.subr.bf16.mxu0 0
  %167 = vmatpush1.bf16.msra.mxu0 0
  %168 = vmatprep.subr.bf16.mxu0 0
  %169 = vmatpush1.bf16.msra.mxu0 0
  %170 = vmatprep.subr.bf16.mxu0 0
  %171 = vmatpush1.bf16.msra.mxu0 0
  %172 = vmatprep.subr.bf16.mxu0 0
  %173 = vmatpush1.bf16.msra.mxu0 0
  %174 = vmatprep.subr.bf16.mxu0 0
  %175 = vmatpush1.bf16.msra.mxu0 0
  %176 = vmatprep.subr.bf16.mxu0 0
  %177 = vmatpush1.bf16.msra.mxu0 0
  %178 = vmatprep.subr.bf16.mxu0 0
  %179 = vmatpush1.bf16.msra.mxu0 0
  %180 = vmatprep.subr.bf16.mxu0 0
  %181 = vmatpush1.bf16.msra.mxu0 0
  %182 = vmatprep.subr.bf16.mxu0 0
  %183 = vmatpush1.bf16.msra.mxu0 0
  %184 = vmatprep.mubr.bf16.mxu0 0
  %185 = vmatmul.mubr.bf16.gmra.mrb[0].mxu0 %v150
  %v186 = vpop.f32.mrb[0].mxu0
  %v187 = vadd.f32 %v46, %v186
  %v188 = vpop.f32.mrb[0].mxu0
  %v189 = vadd.f32 %v46, %v188
  %v190 = vpop.f32.mrb[0].mxu0
  %v191 = vpop.f32.mrb[0].mxu0
  %192 = vdwg.mxu0
  %193 = vmatprep.subr.bf16.mxu0 %v111
  %194 = vmatpush1.bf16.msra.mxu0 %v110
  %195 = vmatprep.subr.bf16.mxu0 %v115
  %196 = vmatpush1.bf16.msra.mxu0 %v114
  %197 = vmatprep.subr.bf16.mxu0 %v119
  %198 = vmatpush1.bf16.msra.mxu0 %v118
  %199 = vmatprep.subr.bf16.mxu0 %v123
  %200 = vmatpush1.bf16.msra.mxu0 %v122
  %201 = vmatprep.subr.bf16.mxu0 %v127
  %202 = vmatpush1.bf16.msra.mxu0 %v126
  %203 = vmatprep.subr.bf16.mxu0 0
  %204 = vmatpush1.bf16.msra.mxu0 0
  %205 = vmatprep.subr.bf16.mxu0 0
  %206 = vmatpush1.bf16.msra.mxu0 0
  %207 = vmatprep.subr.bf16.mxu0 0
  %208 = vmatpush1.bf16.msra.mxu0 0
  %209 = vmatprep.subr.bf16.mxu0 0
  %210 = vmatpush1.bf16.msra.mxu0 0
  %211 = vmatprep.subr.bf16.mxu0 0
  %212 = vmatpush1.bf16.msra.mxu0 0
  %213 = vmatprep.subr.bf16.mxu0 0
  %214 = vmatpush1.bf16.msra.mxu0 0
  %215 = vmatprep.subr.bf16.mxu0 0
  %216 = vmatpush1.bf16.msra.mxu0 0
  %217 = vmatprep.subr.bf16.mxu0 0
  %218 = vmatpush1.bf16.msra.mxu0 0
  %219 = vmatprep.subr.bf16.mxu0 0
  %220 = vmatpush1.bf16.msra.mxu0 0
  %221 = vmatprep.subr.bf16.mxu0 0
  %222 = vmatpush1.bf16.msra.mxu0 0
  %223 = vmatprep.subr.bf16.mxu0 0
  %224 = vmatpush1.bf16.msra.mxu0 0
  %225 = vmatprep.mubr.bf16.mxu0 0
  %226 = vmatmul.mubr.bf16.gmra.mrb[0].mxu0 %v150
  %v227 = vpop.f32.mrb[0].mxu0
  %v228 = vadd.f32 %v46, %v227
  %v229 = vpop.f32.mrb[0].mxu0
  %v230 = vadd.f32 %v46, %v229
  %v231 = vpop.f32.mrb[0].mxu0
  %v232 = vpop.f32.mrb[0].mxu0
  %233 = vdwg.mxu0
  %v234 = vmax.f32 %v187, 0.0
  %v235 = vmax.f32 %v189, 0.0
  %v236 = vmax.f32 %v228, 0.0
  %v237 = vmax.f32 %v230, 0.0
  %v238 = vpack.c.bf16 %v234, %v234
  %v239 = vpack.c.bf16 %v235, %v235
  %v240 = vpack.c.bf16 %v236, %v236
  %v241 = vpack.c.bf16 %v237, %v237
  %v242 = vld [vmem:[%s3] sm:$0xf]
  %v243 = vld [vmem:[%s3 + $0x4] sm:$0xf]
  %v244 = vld [vmem:[%s4] sm:$0xff]
  %v245 = vld [vmem:[%s4 + $0x8] sm:$0xff]
  %247 = vset.pattern.permute.xlu0 0
  %248 = vperm.xlu0 %247, %v244
  %v249 = vpop.permute.xlu0 %248
  %252 = vset.pattern.permute.xlu0 0
  %253 = vperm.xlu0 %252, %v245
  %v254 = vpop.permute.xlu0 %253
  %v258 = vunpack.c.l.b16 %v242
  %v259 = vunpack.c.l.b16 %v243
  %v260 = vpack.c.b16 %v259, %v258
  %vm261 = vcmask 31744
  %v263 = vsel %vm261, %v260, 0
  %vm265 = vcmask 1041408
  %v267 = vsel %vm265, %v238, 0
  %v270 = vsel %vm265, %v239, 0
  %v273 = vsel %vm265, %v240, 0
  %v276 = vsel %vm265, %v241, 0
  %278 = vmatprep.subr.bf16.mxu0 %v270
  %279 = vmatpush1.bf16.msra.mxu0 %v267
  %280 = vmatprep.subr.bf16.mxu0 0
  %281 = vmatpush1.bf16.msra.mxu0 0
  %282 = vmatprep.subr.bf16.mxu0 0
  %283 = vmatpush1.bf16.msra.mxu0 0
  %284 = vmatprep.subr.bf16.mxu0 0
  %285 = vmatpush1.bf16.msra.mxu0 0
  %286 = vmatprep.subr.bf16.mxu0 0
  %287 = vmatpush1.bf16.msra.mxu0 0
  %288 = vmatprep.subr.bf16.mxu0 0
  %289 = vmatpush1.bf16.msra.mxu0 0
  %290 = vmatprep.subr.bf16.mxu0 0
  %291 = vmatpush1.bf16.msra.mxu0 0
  %292 = vmatprep.subr.bf16.mxu0 0
  %293 = vmatpush1.bf16.msra.mxu0 0
  %294 = vmatprep.subr.bf16.mxu0 0
  %295 = vmatpush1.bf16.msra.mxu0 0
  %296 = vmatprep.subr.bf16.mxu0 0
  %297 = vmatpush1.bf16.msra.mxu0 0
  %298 = vmatprep.subr.bf16.mxu0 0
  %299 = vmatpush1.bf16.msra.mxu0 0
  %300 = vmatprep.subr.bf16.mxu0 0
  %301 = vmatpush1.bf16.msra.mxu0 0
  %302 = vmatprep.subr.bf16.mxu0 0
  %303 = vmatpush1.bf16.msra.mxu0 0
  %304 = vmatprep.subr.bf16.mxu0 0
  %305 = vmatpush1.bf16.msra.mxu0 0
  %306 = vmatprep.subr.bf16.mxu0 0
  %307 = vmatpush1.bf16.msra.mxu0 0
  %308 = vmatprep.subr.bf16.mxu0 0
  %309 = vmatpush1.bf16.msra.mxu0 0
  %310 = vmatprep.mubr.bf16.mxu0 0
  %311 = vmatmul.mubr.bf16.gmra.mrb[0].mxu0 %v263
  %v312 = vpop.f32.mrb[0].mxu0
  %v313 = vadd.f32 %v249, %v312
  %v314 = vpop.f32.mrb[0].mxu0
  %v315 = vadd.f32 %v249, %v314
  %v316 = vpop.f32.mrb[0].mxu0
  %v317 = vadd.f32 %v254, %v316
  %v318 = vpop.f32.mrb[0].mxu0
  %v319 = vadd.f32 %v254, %v318
  %320 = vdwg.mxu0
  %321 = vmatprep.subr.bf16.mxu0 %v276
  %322 = vmatpush1.bf16.msra.mxu0 %v273
  %323 = vmatprep.subr.bf16.mxu0 0
  %324 = vmatpush1.bf16.msra.mxu0 0
  %325 = vmatprep.subr.bf16.mxu0 0
  %326 = vmatpush1.bf16.msra.mxu0 0
  %327 = vmatprep.subr.bf16.mxu0 0
  %328 = vmatpush1.bf16.msra.mxu0 0
  %329 = vmatprep.subr.bf16.mxu0 0
  %330 = vmatpush1.bf16.msra.mxu0 0
  %331 = vmatprep.subr.bf16.mxu0 0
  %332 = vmatpush1.bf16.msra.mxu0 0
  %333 = vmatprep.subr.bf16.mxu0 0
  %334 = vmatpush1.bf16.msra.mxu0 0
  %335 = vmatprep.subr.bf16.mxu0 0
  %336 = vmatpush1.bf16.msra.mxu0 0
  %337 = vmatprep.subr.bf16.mxu0 0
  %338 = vmatpush1.bf16.msra.mxu0 0
  %339 = vmatprep.subr.bf16.mxu0 0
  %340 = vmatpush1.bf16.msra.mxu0 0
  %341 = vmatprep.subr.bf16.mxu0 0
  %342 = vmatpush1.bf16.msra.mxu0 0
  %343 = vmatprep.subr.bf16.mxu0 0
  %344 = vmatpush1.bf16.msra.mxu0 0
  %345 = vmatprep.subr.bf16.mxu0 0
  %346 = vmatpush1.bf16.msra.mxu0 0
  %347 = vmatprep.subr.bf16.mxu0 0
  %348 = vmatpush1.bf16.msra.mxu0 0
  %349 = vmatprep.subr.bf16.mxu0 0
  %350 = vmatpush1.bf16.msra.mxu0 0
  %351 = vmatprep.subr.bf16.mxu0 0
  %352 = vmatpush1.bf16.msra.mxu0 0
  %353 = vmatprep.mubr.bf16.mxu0 0
  %354 = vmatmul.mubr.bf16.gmra.mrb[0].mxu0 %v263
  %v355 = vpop.f32.mrb[0].mxu0
  %v356 = vadd.f32 %v249, %v355
  %v357 = vpop.f32.mrb[0].mxu0
  %v358 = vadd.f32 %v249, %v357
  %v359 = vpop.f32.mrb[0].mxu0
  %v360 = vadd.f32 %v254, %v359
  %v361 = vpop.f32.mrb[0].mxu0
  %v362 = vadd.f32 %v254, %v361
  %363 = vdwg.mxu0
  %v364 = vmax.f32 %v313, 0.0
  %v365 = vmax.f32 %v315, 0.0
  %v366 = vmax.f32 %v356, 0.0
  %v367 = vmax.f32 %v358, 0.0
  %v368 = vmax.f32 %v317, 0.0
  %v369 = vmax.f32 %v319, 0.0
  %v370 = vmax.f32 %v360, 0.0
  %v371 = vmax.f32 %v362, 0.0
  %372 = vst [vmem:[%s5] sm:$0xff] %v364
  %373 = vst [vmem:[%s5 + $0x8] sm:$0xff] %v365
  %374 = vst [vmem:[%s5 + $0x10] sm:$0xff] %v366
  %375 = vst [vmem:[%s5 + $0x18] sm:$0xff] %v367
  %376 = vst [vmem:[%s5 + $0x20] sm:$0xff] %v368
  %377 = vst [vmem:[%s5 + $0x28] sm:$0xff] %v369
  %378 = vst [vmem:[%s5 + $0x30] sm:$0xff] %v370
  %379 = vst [vmem:[%s5 + $0x38] sm:$0xff] %v371
  // Predicated region
  $region22: #{dense_block_light_forward.1} parent=0 // pred_check
    _
  $region23: #{dense_block_light_forward.1} parent=0 // pred_check_branch
    %381 = sbr.rel (0) target = $region25
  $region24: #{dense_block_light_forward.1} parent=0 // pred_region
    _
  $region25: #{dense_block_light_forward.1} parent=0 // pred_fallthru
    _
  // Predicated region
  $region26: #{dense_block_light_forward.1} parent=0 // pred_check
    _
  $region27: #{dense_block_light_forward.1} parent=0 // pred_check_branch
    %383 = sbr.rel (0) target = $region29
  $region28: #{dense_block_light_forward.1} parent=0 // pred_region
    _
  $region29: #{dense_block_light_forward.1} parent=0 // pred_fallthru
    _

</llo_original>
